<compile_context>
chip_gen: v5e
topology: v5e:2x2
jax: 0.10.0
libtpu: 0.0.40
codegen_flags: <defaults>
</compile_context>

<pallas_src>
import jax
import jax.numpy as jnp
from jax.experimental import pallas as pl
from jax.experimental.pallas import tpu as pltpu


def autopad(k, p=None, d=1):
    if d > 1:
        k = d * (k - 1) + 1
    if p is None:
        p = k // 2
    return p


def _round_up(x, m):
    return ((x + m - 1) // m) * m


# ---------------------------------------------------------------------------
# Pallas kernel: tiled (tm, tk) @ (tk, tn) accumulate -> BN affine -> AReLU
# ---------------------------------------------------------------------------
def _conv_bn_arelu_kernel(x_ref, w_ref, scale_ref, shift_ref, ab_ref,
                          o_ref, acc_ref):
    k_idx = pl.program_id(2)

    @pl.when(k_idx == 0)
    def _():
        acc_ref[...] = jnp.zeros_like(acc_ref)

    acc_ref[...] += jnp.dot(x_ref[...], w_ref[...],
                            preferred_element_type=jnp.float32)

    @pl.when(k_idx == pl.num_programs(2) - 1)
    def _():
        alpha = ab_ref[0]      # SMEM scalar
        beta = ab_ref[1]       # SMEM scalar
        # BatchNorm (eval) folded to a per-channel affine.
        y = acc_ref[...] * scale_ref[...] + shift_ref[...]
        # AReLU: relu(y)*beta - relu(-y)*alpha == y * where(y > 0, beta, alpha)
        o_ref[...] = (y * jnp.where(y > 0, beta, alpha)).astype(o_ref.dtype)


def _fused_matmul_bn_arelu(patches, w_mat, scale, shift, ab, *, tm=256):
    """patches: (M, K) bf16, w_mat: (K, C_out) bf16, scale/shift: (1, C_out) f32,
    ab: (2,) f32 = [alpha, beta].  Returns (M, C_out) f32."""
    M, K = patches.shape
    C_out = w_mat.shape[1]

    # --- tile selection -----------------------------------------------------
    # Channel/output dim: lane-dense (multiple of 128; 256 matches v6e/v7x MXU).
    N_pad = _round_up(C_out, 128)
    tn = 256 if N_pad % 256 == 0 else 128

    # Contraction dim: keep fully resident when small (block == full extent is
    # legal and avoids padding the large patch matrix); tile at 128/256 when
    # large so the weight block stays MXU-sized and VMEM-bounded.
    if K <= 512:
        K_pad, tk = K, K
    else:
        tk = 256 if _round_up(K, 128) % 256 == 0 else 128
        K_pad = _round_up(K, tk)

    # Row tile: 256 amortizes per-grid-step overhead well on v5e/v6e/v7x and
    # keeps >=2 M tiles for megacore sharding; sweep to 512-1024 on v6e when
    # K is small.
    tm = min(tm, _round_up(M, 8))
    M_pad = _round_up(M, tm)

    # --- padding (single pad per operand, only when actually needed) --------
    if (M_pad, K_pad) != (M, K):
        patches = jnp.pad(patches, ((0, M_pad - M), (0, K_pad - K)))
    if (K_pad, N_pad) != tuple(w_mat.shape):
        w_mat = jnp.pad(w_mat, ((0, K_pad - K), (0, N_pad - C_out)))
    if N_pad != C_out:
        scale = jnp.pad(scale, ((0, 0), (0, N_pad - C_out)))
        shift = jnp.pad(shift, ((0, 0), (0, N_pad - C_out)))

    grid = (M_pad // tm, N_pad // tn, K_pad // tk)

    out = pl.pallas_call(
        _conv_bn_arelu_kernel,
        out_shape=jax.ShapeDtypeStruct((M_pad, N_pad), jnp.float32),
        grid_spec=pltpu.PrefetchScalarGridSpec(
            num_scalar_prefetch=0,
            grid=grid,
            in_specs=[
                pl.BlockSpec((tm, tk), lambda i, j, kk: (i, kk)),
                pl.BlockSpec((tk, tn), lambda i, j, kk: (kk, j)),
                pl.BlockSpec((1, tn), lambda i, j, kk: (0, j)),
                pl.BlockSpec((1, tn), lambda i, j, kk: (0, j)),
                pl.BlockSpec(memory_space=pltpu.MemorySpace.SMEM),
            ],
            out_specs=pl.BlockSpec((tm, tn), lambda i, j, kk: (i, j)),
            scratch_shapes=[pltpu.VMEM((tm, tn), jnp.float32)],
        ),
        compiler_params=pltpu.CompilerParams(
            dimension_semantics=("parallel", "parallel", "arbitrary")),
    )(patches, w_mat, scale, shift, ab)

    return out[:M, :C_out]


# ---------------------------------------------------------------------------
# Host-side glue: patch-matrix construction + weight reshape + NCHW plumbing
# ---------------------------------------------------------------------------
def _im2col(x_nhwc, k, s, p, d):
    N, H, W, C = x_nhwc.shape
    x_p = jnp.pad(x_nhwc, ((0, 0), (p, p), (p, p), (0, 0)))
    H_out = (H + 2 * p - d * (k - 1) - 1) // s + 1
    W_out = (W + 2 * p - d * (k - 1) - 1) // s + 1
    cols = []
    for ki in range(k):
        for kj in range(k):
            patch = x_p[:,
                        ki * d: ki * d + s * (H_out - 1) + 1: s,
                        kj * d: kj * d + s * (W_out - 1) + 1: s,
                        :]
            cols.append(patch)                       # (N, H_out, W_out, C)
    cols = jnp.stack(cols, axis=3)                   # (N, H_out, W_out, k*k, C)
    return cols.reshape(N * H_out * W_out, k * k * C), H_out, W_out


def conv_forward(x_nchw, weight, bn_gamma, bn_beta, bn_mean, bn_var,
                 arelu_alpha, arelu_beta, *, k=1, s=1, p=None, d=1,
                 eps=1e-5):
    """Replicates Conv.forward: act(bn(conv(x))).  x is NCHW (PyTorch layout)."""
    # TODO(synk): grouped convolution (g > 1) not implemented; assumes g == 1.
    p = autopad(k, p, d)
    N, C_in, H, W = x_nchw.shape
    C_out = weight.shape[0]

    # NCHW -> NHWC in bf16 (MXU input dtype; accumulation stays f32 in-kernel).
    x_nhwc = jnp.transpose(x_nchw, (0, 2, 3, 1)).astype(jnp.bfloat16)

    if k == 1 and s == 1 and p == 0:
        # 1x1 conv: the patch matrix is just a reshape -- no im2col copy.
        patches = x_nhwc.reshape(N * H * W, C_in)
        H_out, W_out = H, W
    else:
        # TODO(synk): for k > 1 the im2col patch matrix duplicates input rows
        # k*k times in HBM; fusing im2col into the kernel (grid axis over the
        # k*k taps accumulating into the VMEM scratch) would remove that
        # bandwidth. Kept host-side for now.
        patches, H_out, W_out = _im2col(x_nhwc, k, s, p, d)

    # PyTorch weight (C_out, C_in, k, k) -> (k, k, C_in, C_out) -> (K, C_out).
    w_mat = jnp.transpose(weight, (2, 3, 1, 0)).reshape(k * k * C_in, C_out)
    w_mat = w_mat.astype(jnp.bfloat16)

    # Fold BatchNorm (eval) into a per-channel affine (f32).
    scale = (bn_gamma.astype(jnp.float32) /
             jnp.sqrt(bn_var.astype(jnp.float32) + eps)).reshape(1, C_out)
    shift = (bn_beta.astype(jnp.float32) -
             bn_mean.astype(jnp.float32) * scale[0]).reshape(1, C_out)

    # AReLU parameters as traced f32 scalars (passed via SMEM; jit-safe,
    # no host sync, no recompiles when they change).
    alpha_eff = jnp.clip(arelu_alpha, 0.01, 0.99).astype(jnp.float32).reshape(())
    beta_eff = (1.0 + jax.nn.sigmoid(arelu_beta)).astype(jnp.float32).reshape(())
    ab = jnp.stack([alpha_eff, beta_eff])

    out = _fused_matmul_bn_arelu(patches, w_mat, scale, shift, ab)

    # (M, C_out) -> NCHW
    out = out.reshape(N, H_out, W_out, C_out)
    return jnp.transpose(out, (0, 3, 1, 2))


# ---------------------------------------------------------------------------
# Pure-JAX reference (silent correctness check)
# ---------------------------------------------------------------------------
def _reference(x_nchw, weight, bn_gamma, bn_beta, bn_mean, bn_var,
               arelu_alpha, arelu_beta, *, k=1, s=1, p=None, d=1, eps=1e-5):
    p = autopad(k, p, d)
    y = jax.lax.conv_general_dilated(
        x_nchw.astype(jnp.float32), weight.astype(jnp.float32),
        window_strides=(s, s), padding=[(p, p), (p, p)],
        rhs_dilation=(d, d),
        dimension_numbers=("NCHW", "OIHW", "NCHW"))
    g = bn_gamma.reshape(1, -1, 1, 1)
    b = bn_beta.reshape(1, -1, 1, 1)
    m = bn_mean.reshape(1, -1, 1, 1)
    v = bn_var.reshape(1, -1, 1, 1)
    y = (y - m) / jnp.sqrt(v + eps) * g + b
    alpha = jnp.clip(arelu_alpha, 0.01, 0.99)
    beta = 1.0 + jax.nn.sigmoid(arelu_beta)
    return jnp.maximum(y, 0.0) * beta - jnp.maximum(-y, 0.0) * alpha


if __name__ == "__main__":
    key = jax.random.PRNGKey(0)
    k_x, k_w, k_g, k_b, k_m, k_v = jax.random.split(key, 6)

    # Conv(c1=4, c2=8) with defaults: k=1, s=1, p=autopad=0, g=1, d=1
    N, C_in, H, W = 2, 4, 16, 16
    C_out, K = 8, 1

    x = jax.random.normal(k_x, (N, C_in, H, W), dtype=jnp.float32)
    weight = jax.random.normal(k_w, (C_out, C_in, K, K), dtype=jnp.float32) * 0.2
    bn_gamma = 1.0 + 0.1 * jax.random.normal(k_g, (C_out,), dtype=jnp.float32)
    bn_beta = 0.1 * jax.random.normal(k_b, (C_out,), dtype=jnp.float32)
    bn_mean = 0.1 * jax.random.normal(k_m, (C_out,), dtype=jnp.float32)
    bn_var = jnp.abs(jax.random.normal(k_v, (C_out,), dtype=jnp.float32)) + 0.5
    arelu_alpha = jnp.float32(0.9)   # AReLU default alpha
    arelu_beta = jnp.float32(2.0)    # AReLU default beta

    out = conv_forward(x, weight, bn_gamma, bn_beta, bn_mean, bn_var,
                       arelu_alpha, arelu_beta, k=K, s=1, p=None, d=1)
    out = jax.block_until_ready(out)

    ref = _reference(x, weight, bn_gamma, bn_beta, bn_mean, bn_var,
                     arelu_alpha, arelu_beta, k=K, s=1, p=None, d=1)
    assert out.shape == (N, C_out, H, W)
    # bf16 MXU inputs with f32 accumulation -> loosened tolerance vs f32 ref.
    assert jnp.allclose(out, ref, atol=3e-2, rtol=3e-2)

    print("KERNEL_OK")
</pallas_src>

<mosaic_0001>
module attributes {stable_mosaic.version = 11 : i64} {
  func.func @_conv_bn_arelu_kernel(%arg0: i32, %arg1: i32, %arg2: i32, %arg3: memref<256x4xbf16, #tpu.memory_space<vmem>>, %arg4: memref<4x128xbf16, #tpu.memory_space<vmem>>, %arg5: memref<1x128xf32, #tpu.memory_space<vmem>>, %arg6: memref<1x128xf32, #tpu.memory_space<vmem>>, %arg7: memref<2xf32, #tpu.memory_space<smem>>, %arg8: memref<256x128xf32, #tpu.memory_space<vmem>>, %arg9: memref<256x128xf32, #tpu.memory_space<vmem>>) attributes {dimension_semantics = [#tpu.dimension_semantics<parallel>, #tpu.dimension_semantics<parallel>, #tpu.dimension_semantics<arbitrary>], iteration_bounds = array<i64: 2, 1, 1>, scalar_prefetch = 0 : i64, scratch_operands = 1 : i64, tpu.core_type = #tpu.core_type<tc>, window_params = [{transform_indices = @transform_0, window_bounds = array<i64: 256, 4>}, {transform_indices = @transform_1, window_bounds = array<i64: 4, 128>}, {transform_indices = @transform_2, window_bounds = array<i64: 1, 128>}, {transform_indices = @transform_3, window_bounds = array<i64: 1, 128>}, {transform_indices = @transform_4, window_bounds = array<i64: 2>}, {transform_indices = @transform_5, window_bounds = array<i64: 256, 128>}]} {
    %c0_i32 = arith.constant 0 : i32
    %0 = arith.cmpi eq, %arg2, %c0_i32 : i32
    %1 = arith.extui %0 : i1 to i32
    %c0_i32_0 = arith.constant 0 : i32
    %2 = arith.cmpi ne, %1, %c0_i32_0 : i32
    scf.if %2 {
      %cst_10 = arith.constant 0.000000e+00 : f32
      %12 = vector.broadcast %cst_10 : f32 to vector<256x128xf32>
      %c0_11 = arith.constant 0 : index
      %c0_12 = arith.constant 0 : index
      %13 = vector.load %arg9[%c0_11, %c0_12] : memref<256x128xf32, #tpu.memory_space<vmem>>, vector<256x128xf32>
      tpu.vector_store %arg9[%c0_11, %c0_12], %12 {strides = array<i32>} : memref<256x128xf32, #tpu.memory_space<vmem>>, vector<256x128xf32>,
    } else {
    }
    %c0 = arith.constant 0 : index
    %c0_1 = arith.constant 0 : index
    %3 = vector.load %arg9[%c0, %c0_1] : memref<256x128xf32, #tpu.memory_space<vmem>>, vector<256x128xf32>
    %c0_2 = arith.constant 0 : index
    %c0_3 = arith.constant 0 : index
    %4 = vector.load %arg3[%c0_2, %c0_3] : memref<256x4xbf16, #tpu.memory_space<vmem>>, vector<256x4xbf16>
    %c0_4 = arith.constant 0 : index
    %c0_5 = arith.constant 0 : index
    %5 = vector.load %arg4[%c0_4, %c0_5] : memref<4x128xbf16, #tpu.memory_space<vmem>>, vector<4x128xbf16>
    %cst = arith.constant dense<0.000000e+00> : vector<256x128xf32>
    %6 = tpu.matmul %4, %5, %cst {dimension_numbers = #tpu.dot_dimension_numbers<[1], [0], [0], [1], [0, 0, 1, 1], [], []>} : vector<256x4xbf16>, vector<4x128xbf16>, vector<256x128xf32> -> vector<256x128xf32>
    %7 = arith.addf %3, %6 : vector<256x128xf32>
    %c0_6 = arith.constant 0 : index
    %c0_7 = arith.constant 0 : index
    %8 = vector.load %arg9[%c0_6, %c0_7] : memref<256x128xf32, #tpu.memory_space<vmem>>, vector<256x128xf32>
    tpu.vector_store %arg9[%c0_6, %c0_7], %7 {strides = array<i32>} : memref<256x128xf32, #tpu.memory_space<vmem>>, vector<256x128xf32>,
    %c0_i32_8 = arith.constant 0 : i32
    %9 = arith.cmpi eq, %arg2, %c0_i32_8 : i32
    %10 = arith.extui %9 : i1 to i32
    %c0_i32_9 = arith.constant 0 : i32
    %11 = arith.cmpi ne, %10, %c0_i32_9 : i32
    scf.if %11 {
      %c0_10 = arith.constant 0 : index
      %12 = memref.load %arg7[%c0_10] : memref<2xf32, #tpu.memory_space<smem>>
      %c1 = arith.constant 1 : index
      %13 = memref.load %arg7[%c1] : memref<2xf32, #tpu.memory_space<smem>>
      %c0_11 = arith.constant 0 : index
      %c0_12 = arith.constant 0 : index
      %14 = vector.load %arg9[%c0_11, %c0_12] : memref<256x128xf32, #tpu.memory_space<vmem>>, vector<256x128xf32>
      %c0_13 = arith.constant 0 : index
      %c0_14 = arith.constant 0 : index
      %15 = vector.load %arg5[%c0_13, %c0_14] : memref<1x128xf32, #tpu.memory_space<vmem>>, vector<1x128xf32>
      %16 = vector.broadcast %15 : vector<1x128xf32> to vector<256x128xf32>
      %17 = arith.mulf %14, %16 : vector<256x128xf32>
      %c0_15 = arith.constant 0 : index
      %c0_16 = arith.constant 0 : index
      %18 = vector.load %arg6[%c0_15, %c0_16] : memref<1x128xf32, #tpu.memory_space<vmem>>, vector<1x128xf32>
      %19 = vector.broadcast %18 : vector<1x128xf32> to vector<256x128xf32>
      %20 = arith.addf %17, %19 : vector<256x128xf32>
      %cst_17 = arith.constant 0.000000e+00 : f32
      %21 = vector.broadcast %cst_17 : f32 to vector<256x128xf32>
      %22 = arith.cmpf ogt, %20, %21 : vector<256x128xf32>
      %23 = vector.broadcast %13 : f32 to vector<256x128xf32>
      %24 = vector.broadcast %12 : f32 to vector<256x128xf32>
      %25 = arith.select %22, %23, %24 : vector<256x128xi1>, vector<256x128xf32>
      %26 = arith.mulf %20, %25 : vector<256x128xf32>
      %c0_18 = arith.constant 0 : index
      %c0_19 = arith.constant 0 : index
      %27 = vector.load %arg8[%c0_18, %c0_19] : memref<256x128xf32, #tpu.memory_space<vmem>>, vector<256x128xf32>
      tpu.vector_store %arg8[%c0_18, %c0_19], %26 {strides = array<i32>} : memref<256x128xf32, #tpu.memory_space<vmem>>, vector<256x128xf32>,
    } else {
    }
    return
  }
  func.func @transform_0(%arg0: i32, %arg1: i32, %arg2: i32) -> (i32, i32) {
    %c0_i32 = arith.constant 0 : i32
    return %arg0, %arg2 : i32, i32
  }
  func.func @transform_1(%arg0: i32, %arg1: i32, %arg2: i32) -> (i32, i32) {
    %c0_i32 = arith.constant 0 : i32
    return %arg2, %arg1 : i32, i32
  }
  func.func @transform_2(%arg0: i32, %arg1: i32, %arg2: i32) -> (i32, i32) {
    %c0_i32 = arith.constant 0 : i32
    %c0_i32_0 = arith.constant 0 : i32
    return %c0_i32, %arg1 : i32, i32
  }
  func.func @transform_3(%arg0: i32, %arg1: i32, %arg2: i32) -> (i32, i32) {
    %c0_i32 = arith.constant 0 : i32
    %c0_i32_0 = arith.constant 0 : i32
    return %c0_i32, %arg1 : i32, i32
  }
  func.func @transform_4(%arg0: i32, %arg1: i32, %arg2: i32) -> i32 {
    %c0_i32 = arith.constant 0 : i32
    %c0_i32_0 = arith.constant 0 : i32
    return %c0_i32 : i32
  }
  func.func @transform_5(%arg0: i32, %arg1: i32, %arg2: i32) -> (i32, i32) {
    %c0_i32 = arith.constant 0 : i32
    return %arg0, %arg1 : i32, i32
  }
}

</mosaic_0001>

<llo_original>
// kernel: tpu_custom_call.1
$region0: #{tpu_custom_call.1}
  #allocation0 [shape = 'u32[]', space=smem, size = 0x4, offset = 0x4, fixed_abs, tag = 'smem constant byte address 0x4 - core index']
  #allocation1 [shape = 'u32[72,128]{1,0:T(1,128)}', space=vmem, size = 0x9000, scoped, tag = 'internal scratch']
  #allocation2 [shape = 'f32[256,128]{1,0:T(8,128)}', space=vmem, size = 0x20000, scoped, tag = 'scratch operand']
  %s0 = inlined_call_operand.vmem [shape: bf16[512,4], index: 0, kind: input, shape index: {}]
  %s1 = inlined_call_operand.vmem [shape: bf16[4,128], index: 1, kind: input, shape index: {}]
  %s2 = inlined_call_operand.vmem [shape: f32[1,128], index: 2, kind: input, shape index: {}]
  %s3 = inlined_call_operand.vmem [shape: f32[1,128], index: 3, kind: input, shape index: {}]
  %s4 = inlined_call_operand.vmem [shape: f32[2], index: 4, kind: input, shape index: {}]
  %s5 = inlined_call_operand.hbm [shape: f32[512,128], index: 5, kind: output, shape index: {}]
  %s6 = sld [smem:[#allocation0]]
  $region65: #{tpu_custom_call.1} parent=0
    _
  %s8 = ssub.s32 1, %s6
  %s9 = scalar_select 0, %s8, %s6
  $region1: #{tpu_custom_call.1} parent=0
    #allocation3 [shape = 'u8[512]{0}', space=smem, size = 0x200, scoped, tag = 'input window, operand 4, single buffered']
    #allocation4 [shape = 's32[2]{0}', space=sflag, size = 0x8, scoped, tag = 'scoped memory for tpu_custom_call.1']
    #allocation5 [shape = 's32[2]{0}', space=sflag, size = 0x8, scoped, tag = 'scoped memory for tpu_custom_call.1']
    #allocation6 [shape = 'u8[262144]{0}', space=vmem, size = 0x40000, scoped, tag = 'output window, operand 0']
    %10 = vsyncpa [#allocation5], 0
    %11 = vsyncpa [#allocation4], 0
    %s12 = scalar_lea.sflag [#allocation4], 1
    %13 = vsyncpa %s12, 0
    loop: start=0, step=1, limit=4
    $region2: #{tpu_custom_call.1} parent=1 // loop_pre_header
      _
    $region3: #{tpu_custom_call.1} parent=1 // loop_header
      %s15 = sphi 0, %s19
      %p16 = scmp.ge.s32.totalorder %s15, 4
      %s22 = sphi 0, %s41
      %s23 = sphi 0, %s37
      %s24 = sphi 0, %s33
      %s25 = sphi 0, %s22
      %s26 = sphi 0, %s23
      %s27 = sphi 0, %s24
      %s28 = sphi 0, %s25
      %s29 = sphi 0, %s26
      %s30 = sphi 0, %s27
      %s46 = sphi 0, %s48
      %s49 = sphi 0, %s46
      %s50 = sphi 0, %s49
      %s66 = sphi 0, %s50
      %s74 = sphi 0, %s76
      %s77 = sphi 0, %s74
      %s78 = sphi 0, %s77
      %s94 = sphi 0, %s78
      %s100 = sphi 0, %s102
      %s103 = sphi 0, %s100
      %s104 = sphi 0, %s103
      %s120 = sphi 0, %s104
      %s126 = sphi 0, %s128
      %s129 = sphi 0, %s126
      %s130 = sphi 0, %s129
      %s146 = sphi 0, %s130
      %s150 = sphi 0, %s150
      %s152 = sphi 0, %s150
      %s153 = sphi 0, %s152
      %s167 = sphi 0, %s153
      %s175 = sphi 0, %s177
      %s178 = sphi 0, %s175
      %s179 = sphi 0, %s178
      %s195 = sphi 0, %s179
    $region4: #{tpu_custom_call.1} parent=1 // loop_header_branch
      %18 = sbr.rel (%p16) target = $region8
    $region5: #{tpu_custom_call.1} parent=1 // loop_body
      %s20 = ssub.s32 %s15, 1
      %s21 = ssub.s32 %s15, 2
      %s31 = sadd.s32 1, %s24
      %p32 = scmp.ge.s32.totalorder %s31, 1
      %s33 = scalar_select %p32, 0, %s31
      %s34 = sadd.s32 1, %s23
      %s35 = scalar_select %p32, %s34, %s23
      %p36 = scmp.ge.s32.totalorder %s35, 1
      %s37 = scalar_select %p36, 0, %s35
      %s38 = sadd.s32 1, %s22
      %s39 = scalar_select %p36, %s38, %s22
      %p40 = scmp.ge.s32.totalorder %s39, 2
      %s41 = scalar_select %p40, 0, %s39
      %s42 = ssub.s32 %s22, %s41
      %s43 = ssub.s32 %s24, %s33
      %s44 = sor.u32 %s42, %s43
      %p45 = scmp.eq.s32.totalorder %s44, 0
      %s47 = sadd.s32 %s46, 1
      %s48 = scalar_select %p45, %s46, %s47
      %p51 = pneg %p45
      %p52 = scmp.eq.s32.totalorder %s15, 1
      %p53 = por %p51, %p52
      %p54 = scmp.ne.s32.totalorder %s46, %s49
      %p55 = scmp.eq.s32.totalorder %s15, 0
      %p56 = por %p54, %p55
      %p57 = scmp.ne.s32.totalorder %s46, %s49
      %p58 = scmp.eq.s32.totalorder %s20, 1
      %p59 = por %p57, %p58
      %p60 = scmp.ne.s32.totalorder %s49, %s50
      %p61 = scmp.eq.s32.totalorder %s20, 0
      %p62 = por %p60, %p61
      %p63 = scmp.ne.s32.totalorder %s49, %s50
      %p64 = scmp.eq.s32.totalorder %s21, 1
      %p65 = por %p63, %p64
      %p67 = scmp.ne.s32.totalorder %s50, %s66
      %p68 = scmp.eq.s32.totalorder %s21, 0
      %p69 = por %p67, %p68
      %s70 = ssub.s32 %s24, %s33
      %s71 = ssub.s32 %s23, %s37
      %s72 = sor.u32 %s70, %s71
      %p73 = scmp.eq.s32.totalorder %s72, 0
      %s75 = sadd.s32 %s74, 1
      %s76 = scalar_select %p73, %s74, %s75
      %p79 = pneg %p73
      %p80 = scmp.eq.s32.totalorder %s15, 1
      %p81 = por %p79, %p80
      %p82 = scmp.ne.s32.totalorder %s74, %s77
      %p83 = scmp.eq.s32.totalorder %s15, 0
      %p84 = por %p82, %p83
      %p85 = scmp.ne.s32.totalorder %s74, %s77
      %p86 = scmp.eq.s32.totalorder %s20, 1
      %p87 = por %p85, %p86
      %p88 = scmp.ne.s32.totalorder %s77, %s78
      %p89 = scmp.eq.s32.totalorder %s20, 0
      %p90 = por %p88, %p89
      %p91 = scmp.ne.s32.totalorder %s77, %s78
      %p92 = scmp.eq.s32.totalorder %s21, 1
      %p93 = por %p91, %p92
      %p95 = scmp.ne.s32.totalorder %s78, %s94
      %p96 = scmp.eq.s32.totalorder %s21, 0
      %p97 = por %p95, %p96
      %s98 = ssub.s32 %s23, %s37
      %p99 = scmp.eq.s32.totalorder %s98, 0
      %s101 = sadd.s32 %s100, 1
      %s102 = scalar_select %p99, %s100, %s101
      %p105 = pneg %p99
      %p106 = scmp.eq.s32.totalorder %s15, 1
      %p107 = por %p105, %p106
      %p108 = scmp.ne.s32.totalorder %s100, %s103
      %p109 = scmp.eq.s32.totalorder %s15, 0
      %p110 = por %p108, %p109
      %p111 = scmp.ne.s32.totalorder %s100, %s103
      %p112 = scmp.eq.s32.totalorder %s20, 1
      %p113 = por %p111, %p112
      %p114 = scmp.ne.s32.totalorder %s103, %s104
      %p115 = scmp.eq.s32.totalorder %s20, 0
      %p116 = por %p114, %p115
      %p117 = scmp.ne.s32.totalorder %s103, %s104
      %p118 = scmp.eq.s32.totalorder %s21, 1
      %p119 = por %p117, %p118
      %p121 = scmp.ne.s32.totalorder %s104, %s120
      %p122 = scmp.eq.s32.totalorder %s21, 0
      %p123 = por %p121, %p122
      %s124 = ssub.s32 %s23, %s37
      %p125 = scmp.eq.s32.totalorder %s124, 0
      %s127 = sadd.s32 %s126, 1
      %s128 = scalar_select %p125, %s126, %s127
      %p131 = pneg %p125
      %p132 = scmp.eq.s32.totalorder %s15, 1
      %p133 = por %p131, %p132
      %p134 = scmp.ne.s32.totalorder %s126, %s129
      %p135 = scmp.eq.s32.totalorder %s15, 0
      %p136 = por %p134, %p135
      %p137 = scmp.ne.s32.totalorder %s126, %s129
      %p138 = scmp.eq.s32.totalorder %s20, 1
      %p139 = por %p137, %p138
      %p140 = scmp.ne.s32.totalorder %s129, %s130
      %p141 = scmp.eq.s32.totalorder %s20, 0
      %p142 = por %p140, %p141
      %p143 = scmp.ne.s32.totalorder %s129, %s130
      %p144 = scmp.eq.s32.totalorder %s21, 1
      %p145 = por %p143, %p144
      %p147 = scmp.ne.s32.totalorder %s130, %s146
      %p148 = scmp.eq.s32.totalorder %s21, 0
      %p149 = por %p147, %p148
      %s151 = sadd.s32 %s150, 1
      %p154 = scmp.eq.s32.totalorder %s15, 1
      %p155 = scmp.ne.s32.totalorder %s150, %s152
      %p156 = scmp.eq.s32.totalorder %s15, 0
      %p157 = por %p155, %p156
      %p158 = scmp.ne.s32.totalorder %s150, %s152
      %p159 = scmp.eq.s32.totalorder %s20, 1
      %p160 = por %p158, %p159
      %p161 = scmp.ne.s32.totalorder %s152, %s153
      %p162 = scmp.eq.s32.totalorder %s20, 0
      %p163 = por %p161, %p162
      %p164 = scmp.ne.s32.totalorder %s152, %s153
      %p165 = scmp.eq.s32.totalorder %s21, 1
      %p166 = por %p164, %p165
      %p168 = scmp.ne.s32.totalorder %s153, %s167
      %p169 = scmp.eq.s32.totalorder %s21, 0
      %p170 = por %p168, %p169
      %s171 = ssub.s32 %s22, %s41
      %s172 = ssub.s32 %s23, %s37
      %s173 = sor.u32 %s171, %s172
      %p174 = scmp.eq.s32.totalorder %s173, 0
      %s176 = sadd.s32 %s175, 1
      %s177 = scalar_select %p174, %s175, %s176
      %p180 = pneg %p174
      %p181 = scmp.eq.s32.totalorder %s15, 1
      %p182 = por %p180, %p181
      %p183 = scmp.ne.s32.totalorder %s175, %s178
      %p184 = scmp.eq.s32.totalorder %s15, 0
      %p185 = por %p183, %p184
      %p186 = scmp.ne.s32.totalorder %s175, %s178
      %p187 = scmp.eq.s32.totalorder %s20, 1
      %p188 = por %p186, %p187
      %p189 = scmp.ne.s32.totalorder %s178, %s179
      %p190 = scmp.eq.s32.totalorder %s20, 0
      %p191 = por %p189, %p190
      %p192 = scmp.ne.s32.totalorder %s178, %s179
      %p193 = scmp.eq.s32.totalorder %s21, 1
      %p194 = por %p192, %p193
      %p196 = scmp.ne.s32.totalorder %s179, %s195
      %p197 = scmp.eq.s32.totalorder %s21, 0
      %p198 = por %p196, %p197
      %p199 = scmp.le.s32.totalorder 1, %s15
      %p200 = scmp.lt.s32.totalorder %s15, 3
      %p201 = pnand %p199, %p200
      %p202 = pneg %p201
      // Predicated region
      $region9: #{tpu_custom_call.1} parent=5 // pred_check
        _
      $region10: #{tpu_custom_call.1} parent=5 // pred_check_branch
        %204 = sbr.rel (%p201) target = $region12
      $region11: #{tpu_custom_call.1} parent=5 // pred_region
        %s205 = ssub.s32 %s15, 1
        // Predicated region
        $region13: #{tpu_custom_call.1} parent=11 // pred_check
          %p206 = pneg %p90
        $region14: #{tpu_custom_call.1} parent=11 // pred_check_branch
          %208 = sbr.rel (%p206) target = $region16
        $region15: #{tpu_custom_call.1} parent=11 // pred_region
          %p209 = scmp.lt.s32.totalorder %s27, 0
          %s210 = scalar_select %p209, %s27, 0
          %p211 = scmp.lt.s32.totalorder %s26, 0
          %s212 = scalar_select %p211, %s26, 0
          %s213 = sadd.s32 %s212, %s210
          %s214 = smul.addr %s213, 2
          %s215 = scalar_lea.vmem %s1, %s214
        $region16: #{tpu_custom_call.1} parent=11 // pred_fallthru
          _
        // Predicated region
        $region17: #{tpu_custom_call.1} parent=11 // pred_check
          %p216 = pneg %p116
        $region18: #{tpu_custom_call.1} parent=11 // pred_check_branch
          %218 = sbr.rel (%p216) target = $region20
        $region19: #{tpu_custom_call.1} parent=11 // pred_region
          %p219 = scmp.lt.s32.totalorder %s26, 0
          %s220 = scalar_select %p219, %s26, 0
          %s221 = scalar_lea.vmem %s2, %s220
        $region20: #{tpu_custom_call.1} parent=11 // pred_fallthru
          _
        // Predicated region
        $region21: #{tpu_custom_call.1} parent=11 // pred_check
          %p222 = pneg %p142
        $region22: #{tpu_custom_call.1} parent=11 // pred_check_branch
          %224 = sbr.rel (%p222) target = $region24
        $region23: #{tpu_custom_call.1} parent=11 // pred_region
          %p225 = scmp.lt.s32.totalorder %s26, 0
          %s226 = scalar_select %p225, %s26, 0
          %s227 = scalar_lea.vmem %s3, %s226
        $region24: #{tpu_custom_call.1} parent=11 // pred_fallthru
          _
        // Predicated region
        $region25: #{tpu_custom_call.1} parent=11 // pred_check
          %p228 = pneg %p163
        $region26: #{tpu_custom_call.1} parent=11 // pred_check_branch
          %230 = sbr.rel (%p228) target = $region28
        $region27: #{tpu_custom_call.1} parent=11 // pred_region
          %232 = vsyncadd [#allocation5], 0
          %s234 = sshll.u32 %s4, 4
          %s235 = int_to_ptr.vmem [resolvable:$true] %s234
          %237 = dma.vmem_to_smem %s235, 16, [#allocation3], [#allocation5]
        $region28: #{tpu_custom_call.1} parent=11 // pred_fallthru
          _
      $region12: #{tpu_custom_call.1} parent=5 // pred_fallthru
        _
      %p238 = scmp.lt.s32.totalorder %s15, 2
      // Predicated region
      $region29: #{tpu_custom_call.1} parent=5 // pred_check
        %p239 = pneg %p238
      $region30: #{tpu_custom_call.1} parent=5 // pred_check_branch
        %241 = sbr.rel (%p239) target = $region32
      $region31: #{tpu_custom_call.1} parent=5 // pred_region
        // Predicated region
        $region33: #{tpu_custom_call.1} parent=31 // pred_check
          %p242 = pneg %p56
        $region34: #{tpu_custom_call.1} parent=31 // pred_check_branch
          %244 = sbr.rel (%p242) target = $region36
        $region35: #{tpu_custom_call.1} parent=31 // pred_region
          %s245 = smul.u32 32, %s22
          %p246 = scmp.lt.s32.totalorder %s245, 63
          %s247 = scalar_select %p246, %s245, 63
          %p248 = scmp.lt.s32.totalorder %s24, 0
          %s249 = scalar_select %p248, %s24, 0
          %s250 = sadd.s32 %s249, %s247
          %s251 = smul.addr %s250, 4
          %s252 = scalar_lea.vmem %s0, %s251
          %s253 = smul.u32 32, %s22
        $region36: #{tpu_custom_call.1} parent=31 // pred_fallthru
          _
      $region32: #{tpu_custom_call.1} parent=5 // pred_fallthru
        _
      %p254 = scmp.le.s32.totalorder 1, %s15
      %p255 = scmp.lt.s32.totalorder %s15, 3
      %p256 = pnand %p254, %p255
      %p257 = pneg %p256
      // Predicated region
      $region37: #{tpu_custom_call.1} parent=5 // pred_check
        _
      $region38: #{tpu_custom_call.1} parent=5 // pred_check_branch
        %259 = sbr.rel (%p256) target = $region40
      $region39: #{tpu_custom_call.1} parent=5 // pred_region
        %s260 = ssub.s32 %s15, 1
        // Predicated region
        $region41: #{tpu_custom_call.1} parent=39 // pred_check
          %p261 = pneg %p163
        $region42: #{tpu_custom_call.1} parent=39 // pred_check_branch
          %263 = sbr.rel (%p261) target = $region44
        $region43: #{tpu_custom_call.1} parent=39 // pred_region
          %265 = dma.done [#allocation5], 16
        $region44: #{tpu_custom_call.1} parent=39 // pred_fallthru
          _
        %266 = sfence
        %s267 = smul.u32 32, %s25
        %p268 = scmp.lt.s32.totalorder %s267, 63
        %s269 = scalar_select %p268, %s267, 63
        %p270 = scmp.lt.s32.totalorder %s27, 0
        %s271 = scalar_select %p270, %s27, 0
        %s272 = sadd.s32 %s271, %s269
        %s273 = smul.addr %s272, 4
        %s274 = scalar_lea.vmem %s0, %s273
        %p275 = pneg %p62
        %p276 = pneg %p59
        %p277 = scmp.lt.s32.totalorder %s27, 0
        %s278 = scalar_select %p277, %s27, 0
        %p279 = scmp.lt.s32.totalorder %s26, 0
        %s280 = scalar_select %p279, %s26, 0
        %s281 = sadd.s32 %s280, %s278
        %s282 = smul.addr %s281, 2
        %s283 = scalar_lea.vmem %s1, %s282
        %p284 = pneg %p90
        %p285 = pneg %p87
        %p286 = scmp.lt.s32.totalorder %s26, 0
        %s287 = scalar_select %p286, %s26, 0
        %s288 = scalar_lea.vmem %s2, %s287
        %p289 = pneg %p116
        %p290 = pneg %p113
        %p291 = scmp.lt.s32.totalorder %s26, 0
        %s292 = scalar_select %p291, %s26, 0
        %s293 = scalar_lea.vmem %s3, %s292
        %p294 = pneg %p142
        %p295 = pneg %p139
        %p296 = pneg %p163
        %p297 = pneg %p160
        %p298 = pneg %p191
        %p299 = pneg %p188
        %s300 = sand.u32 %s178, 1
        %s301 = scalar_lea.sflag [#allocation4], %s300
        %s302 = sand.u32 %s178, 1
        %s303 = smul.addr %s302, 256
        %s304 = scalar_lea.vmem [#allocation6], %s303
        %s305 = smul.u32 32, %s25
        %p306 = scmp.lt.s32.totalorder %s305, 63
        %s307 = scalar_select %p306, %s305, 63
        %p308 = scmp.lt.s32.totalorder %s27, 0
        %s309 = scalar_select %p308, %s27, 0
        %s310 = sadd.s32 %s309, %s307
        %s311 = smul.addr %s310, 4
        %s312 = scalar_lea.vmem %s0, %s311
        %s313 = smul.u32 32, %s25
        %p314 = scmp.lt.s32.totalorder %s27, 0
        %s315 = scalar_select %p314, %s27, 0
        %p316 = scmp.lt.s32.totalorder %s26, 0
        %s317 = scalar_select %p316, %s26, 0
        %s318 = sadd.s32 %s317, %s315
        %s319 = smul.addr %s318, 2
        %s320 = scalar_lea.vmem %s1, %s319
        %p321 = scmp.lt.s32.totalorder %s26, 0
        %s322 = scalar_select %p321, %s26, 0
        %s323 = scalar_lea.vmem %s2, %s322
        %p324 = scmp.lt.s32.totalorder %s26, 0
        %s325 = scalar_select %p324, %s26, 0
        %s326 = scalar_lea.vmem %s3, %s325
        %s327 = smul.u32 32, %s25
        %p329 = scmp.eq.s32.totalorder %s27, 0
        // Predicated region
        $region45: #{tpu_custom_call.1} parent=39 // pred_check
          %p330 = pneg %p329
        $region46: #{tpu_custom_call.1} parent=39 // pred_check_branch
          %332 = sbr.rel (%p330) target = $region48
        $region47: #{tpu_custom_call.1} parent=39 // pred_region
          %333 = vst [vmem:[#allocation2] sm:$0xff] 0.0
          %334 = vst [vmem:[#allocation2 + $0x8] sm:$0xff] 0.0
          %335 = vst [vmem:[#allocation2 + $0x10] sm:$0xff] 0.0
          %336 = vst [vmem:[#allocation2 + $0x18] sm:$0xff] 0.0
          %337 = vst [vmem:[#allocation2 + $0x20] sm:$0xff] 0.0
          %338 = vst [vmem:[#allocation2 + $0x28] sm:$0xff] 0.0
          %339 = vst [vmem:[#allocation2 + $0x30] sm:$0xff] 0.0
          %340 = vst [vmem:[#allocation2 + $0x38] sm:$0xff] 0.0
          %341 = vst [vmem:[#allocation2 + $0x40] sm:$0xff] 0.0
          %342 = vst [vmem:[#allocation2 + $0x48] sm:$0xff] 0.0
          %343 = vst [vmem:[#allocation2 + $0x50] sm:$0xff] 0.0
          %344 = vst [vmem:[#allocation2 + $0x58] sm:$0xff] 0.0
          %345 = vst [vmem:[#allocation2 + $0x60] sm:$0xff] 0.0
          %346 = vst [vmem:[#allocation2 + $0x68] sm:$0xff] 0.0
          %347 = vst [vmem:[#allocation2 + $0x70] sm:$0xff] 0.0
          %348 = vst [vmem:[#allocation2 + $0x78] sm:$0xff] 0.0
          %349 = vst [vmem:[#allocation2 + $0x80] sm:$0xff] 0.0
          %350 = vst [vmem:[#allocation2 + $0x88] sm:$0xff] 0.0
          %351 = vst [vmem:[#allocation2 + $0x90] sm:$0xff] 0.0
          %352 = vst [vmem:[#allocation2 + $0x98] sm:$0xff] 0.0
          %353 = vst [vmem:[#allocation2 + $0xa0] sm:$0xff] 0.0
          %354 = vst [vmem:[#allocation2 + $0xa8] sm:$0xff] 0.0
          %355 = vst [vmem:[#allocation2 + $0xb0] sm:$0xff] 0.0
          %356 = vst [vmem:[#allocation2 + $0xb8] sm:$0xff] 0.0
          %357 = vst [vmem:[#allocation2 + $0xc0] sm:$0xff] 0.0
          %358 = vst [vmem:[#allocation2 + $0xc8] sm:$0xff] 0.0
          %359 = vst [vmem:[#allocation2 + $0xd0] sm:$0xff] 0.0
          %360 = vst [vmem:[#allocation2 + $0xd8] sm:$0xff] 0.0
          %361 = vst [vmem:[#allocation2 + $0xe0] sm:$0xff] 0.0
          %362 = vst [vmem:[#allocation2 + $0xe8] sm:$0xff] 0.0
          %363 = vst [vmem:[#allocation2 + $0xf0] sm:$0xff] 0.0
          %364 = vst [vmem:[#allocation2 + $0xf8] sm:$0xff] 0.0
        $region48: #{tpu_custom_call.1} parent=39 // pred_fallthru
          _
        %v365 = vld [vmem:[#allocation2] sm:$0xff]
        %v366 = vld [vmem:[#allocation2 + $0x8] sm:$0xff]
        %v367 = vld [vmem:[#allocation2 + $0x10] sm:$0xff]
        %v368 = vld [vmem:[#allocation2 + $0x18] sm:$0xff]
        %v369 = vld [vmem:[#allocation2 + $0x20] sm:$0xff]
        %v370 = vld [vmem:[#allocation2 + $0x28] sm:$0xff]
        %v371 = vld [vmem:[#allocation2 + $0x30] sm:$0xff]
        %v372 = vld [vmem:[#allocation2 + $0x38] sm:$0xff]
        %v373 = vld [vmem:[#allocation2 + $0x40] sm:$0xff]
        %v374 = vld [vmem:[#allocation2 + $0x48] sm:$0xff]
        %v375 = vld [vmem:[#allocation2 + $0x50] sm:$0xff]
        %v376 = vld [vmem:[#allocation2 + $0x58] sm:$0xff]
        %v377 = vld [vmem:[#allocation2 + $0x60] sm:$0xff]
        %v378 = vld [vmem:[#allocation2 + $0x68] sm:$0xff]
        %v379 = vld [vmem:[#allocation2 + $0x70] sm:$0xff]
        %v380 = vld [vmem:[#allocation2 + $0x78] sm:$0xff]
        %v381 = vld [vmem:[#allocation2 + $0x80] sm:$0xff]
        %v382 = vld [vmem:[#allocation2 + $0x88] sm:$0xff]
        %v383 = vld [vmem:[#allocation2 + $0x90] sm:$0xff]
        %v384 = vld [vmem:[#allocation2 + $0x98] sm:$0xff]
        %v385 = vld [vmem:[#allocation2 + $0xa0] sm:$0xff]
        %v386 = vld [vmem:[#allocation2 + $0xa8] sm:$0xff]
        %v387 = vld [vmem:[#allocation2 + $0xb0] sm:$0xff]
        %v388 = vld [vmem:[#allocation2 + $0xb8] sm:$0xff]
        %v389 = vld [vmem:[#allocation2 + $0xc0] sm:$0xff]
        %v390 = vld [vmem:[#allocation2 + $0xc8] sm:$0xff]
        %v391 = vld [vmem:[#allocation2 + $0xd0] sm:$0xff]
        %v392 = vld [vmem:[#allocation2 + $0xd8] sm:$0xff]
        %v393 = vld [vmem:[#allocation2 + $0xe0] sm:$0xff]
        %v394 = vld [vmem:[#allocation2 + $0xe8] sm:$0xff]
        %v395 = vld [vmem:[#allocation2 + $0xf0] sm:$0xff]
        %v396 = vld [vmem:[#allocation2 + $0xf8] sm:$0xff]
        %v397 = vld [vmem:[%s312] sm:$0xf]
        %v398 = vld [vmem:[%s312 + $0x4] sm:$0xf]
        %v399 = vld [vmem:[%s312 + $0x8] sm:$0xf]
        %v400 = vld [vmem:[%s312 + $0xc] sm:$0xf]
        %v401 = vld [vmem:[%s312 + $0x10] sm:$0xf]
        %v402 = vld [vmem:[%s312 + $0x14] sm:$0xf]
        %v403 = vld [vmem:[%s312 + $0x18] sm:$0xf]
        %v404 = vld [vmem:[%s312 + $0x1c] sm:$0xf]
        %v405 = vld [vmem:[%s312 + $0x20] sm:$0xf]
        %v406 = vld [vmem:[%s312 + $0x24] sm:$0xf]
        %v407 = vld [vmem:[%s312 + $0x28] sm:$0xf]
        %v408 = vld [vmem:[%s312 + $0x2c] sm:$0xf]
        %v409 = vld [vmem:[%s312 + $0x30] sm:$0xf]
        %v410 = vld [vmem:[%s312 + $0x34] sm:$0xf]
        %v411 = vld [vmem:[%s312 + $0x38] sm:$0xf]
        %v412 = vld [vmem:[%s312 + $0x3c] sm:$0xf]
        %v413 = vld [vmem:[%s312 + $0x40] sm:$0xf]
        %v414 = vld [vmem:[%s312 + $0x44] sm:$0xf]
        %v415 = vld [vmem:[%s312 + $0x48] sm:$0xf]
        %v416 = vld [vmem:[%s312 + $0x4c] sm:$0xf]
        %v417 = vld [vmem:[%s312 + $0x50] sm:$0xf]
        %v418 = vld [vmem:[%s312 + $0x54] sm:$0xf]
        %v419 = vld [vmem:[%s312 + $0x58] sm:$0xf]
        %v420 = vld [vmem:[%s312 + $0x5c] sm:$0xf]
        %v421 = vld [vmem:[%s312 + $0x60] sm:$0xf]
        %v422 = vld [vmem:[%s312 + $0x64] sm:$0xf]
        %v423 = vld [vmem:[%s312 + $0x68] sm:$0xf]
        %v424 = vld [vmem:[%s312 + $0x6c] sm:$0xf]
        %v425 = vld [vmem:[%s312 + $0x70] sm:$0xf]
        %v426 = vld [vmem:[%s312 + $0x74] sm:$0xf]
        %v427 = vld [vmem:[%s312 + $0x78] sm:$0xf]
        %v428 = vld [vmem:[%s312 + $0x7c] sm:$0xf]
        %v429 = vld [vmem:[%s320] sm:$0x3]
        %v462 = vunpack.c.l.b16 %v397
        %v463 = vunpack.c.l.b16 %v398
        %v464 = vunpack.c.l.b16 %v399
        %v465 = vunpack.c.l.b16 %v400
        %v466 = vunpack.c.l.b16 %v401
        %v467 = vunpack.c.l.b16 %v402
        %v468 = vunpack.c.l.b16 %v403
        %v469 = vunpack.c.l.b16 %v404
        %v470 = vunpack.c.l.b16 %v405
        %v471 = vunpack.c.l.b16 %v406
        %v472 = vunpack.c.l.b16 %v407
        %v473 = vunpack.c.l.b16 %v408
        %v474 = vunpack.c.l.b16 %v409
        %v475 = vunpack.c.l.b16 %v410
        %v476 = vunpack.c.l.b16 %v411
        %v477 = vunpack.c.l.b16 %v412
        %v478 = vunpack.c.l.b16 %v413
        %v479 = vunpack.c.l.b16 %v414
        %v480 = vunpack.c.l.b16 %v415
        %v481 = vunpack.c.l.b16 %v416
        %v482 = vunpack.c.l.b16 %v417
        %v483 = vunpack.c.l.b16 %v418
        %v484 = vunpack.c.l.b16 %v419
        %v485 = vunpack.c.l.b16 %v420
        %v486 = vunpack.c.l.b16 %v421
        %v487 = vunpack.c.l.b16 %v422
        %v488 = vunpack.c.l.b16 %v423
        %v489 = vunpack.c.l.b16 %v424
        %v490 = vunpack.c.l.b16 %v425
        %v491 = vunpack.c.l.b16 %v426
        %v492 = vunpack.c.l.b16 %v427
        %v493 = vunpack.c.l.b16 %v428
        %v494 = vpack.c.b16 %v463, %v462
        %v495 = vpack.c.b16 %v465, %v464
        %v496 = vpack.c.b16 %v467, %v466
        %v497 = vpack.c.b16 %v469, %v468
        %v498 = vpack.c.b16 %v471, %v470
        %v499 = vpack.c.b16 %v473, %v472
        %v500 = vpack.c.b16 %v475, %v474
        %v501 = vpack.c.b16 %v477, %v476
        %v502 = vpack.c.b16 %v479, %v478
        %v503 = vpack.c.b16 %v481, %v480
        %v504 = vpack.c.b16 %v483, %v482
        %v505 = vpack.c.b16 %v485, %v484
        %v506 = vpack.c.b16 %v487, %v486
        %v507 = vpack.c.b16 %v489, %v488
        %v508 = vpack.c.b16 %v491, %v490
        %v509 = vpack.c.b16 %v493, %v492
        %vm510 = vcmask 31744
        %v512 = vsel %vm510, %v494, 0
        %v515 = vsel %vm510, %v495, 0
        %v518 = vsel %vm510, %v496, 0
        %v521 = vsel %vm510, %v497, 0
        %v524 = vsel %vm510, %v498, 0
        %v527 = vsel %vm510, %v499, 0
        %v530 = vsel %vm510, %v500, 0
        %v533 = vsel %vm510, %v501, 0
        %v536 = vsel %vm510, %v502, 0
        %v539 = vsel %vm510, %v503, 0
        %v542 = vsel %vm510, %v504, 0
        %v545 = vsel %vm510, %v505, 0
        %v548 = vsel %vm510, %v506, 0
        %v551 = vsel %vm510, %v507, 0
        %v554 = vsel %vm510, %v508, 0
        %v557 = vsel %vm510, %v509, 0
        %vm559 = vcmask 1041408
        %v561 = vsel %vm559, %v429, 0
        %563 = vmatpush.bf16.msra.mxu0 0
        %564 = vmatpush.bf16.msra.mxu0 0
        %565 = vmatpush.bf16.msra.mxu0 0
        %566 = vmatpush.bf16.msra.mxu0 0
        %567 = vmatpush.bf16.msra.mxu0 0
        %568 = vmatpush.bf16.msra.mxu0 0
        %569 = vmatpush.bf16.msra.mxu0 0
        %570 = vmatpush.bf16.msra.mxu0 %v561
        %571 = vmatmul.bf16.gmra.mxu0 %v512
        %v572 = vpop.f32.mrf.mxu0
        %v573 = vadd.f32 0.0, %v572
        %v574 = vpop.f32.mrf.mxu0
        %v575 = vadd.f32 0.0, %v574
        %576 = vmatmul.bf16.gmra.mxu0 %v515
        %v577 = vpop.f32.mrf.mxu0
        %v578 = vadd.f32 0.0, %v577
        %v579 = vpop.f32.mrf.mxu0
        %v580 = vadd.f32 0.0, %v579
        %581 = vmatmul.bf16.gmra.mxu0 %v518
        %v582 = vpop.f32.mrf.mxu0
        %v583 = vadd.f32 0.0, %v582
        %v584 = vpop.f32.mrf.mxu0
        %v585 = vadd.f32 0.0, %v584
        %586 = vmatmul.bf16.gmra.mxu0 %v521
        %v587 = vpop.f32.mrf.mxu0
        %v588 = vadd.f32 0.0, %v587
        %v589 = vpop.f32.mrf.mxu0
        %v590 = vadd.f32 0.0, %v589
        %591 = vmatmul.bf16.gmra.mxu0 %v524
        %v592 = vpop.f32.mrf.mxu0
        %v593 = vadd.f32 0.0, %v592
        %v594 = vpop.f32.mrf.mxu0
        %v595 = vadd.f32 0.0, %v594
        %596 = vmatmul.bf16.gmra.mxu0 %v527
        %v597 = vpop.f32.mrf.mxu0
        %v598 = vadd.f32 0.0, %v597
        %v599 = vpop.f32.mrf.mxu0
        %v600 = vadd.f32 0.0, %v599
        %601 = vmatmul.bf16.gmra.mxu0 %v530
        %v602 = vpop.f32.mrf.mxu0
        %v603 = vadd.f32 0.0, %v602
        %v604 = vpop.f32.mrf.mxu0
        %v605 = vadd.f32 0.0, %v604
        %606 = vmatmul.bf16.gmra.mxu0 %v533
        %v607 = vpop.f32.mrf.mxu0
        %v608 = vadd.f32 0.0, %v607
        %v609 = vpop.f32.mrf.mxu0
        %v610 = vadd.f32 0.0, %v609
        %611 = vmatmul.bf16.gmra.mxu0 %v536
        %v612 = vpop.f32.mrf.mxu0
        %v613 = vadd.f32 0.0, %v612
        %v614 = vpop.f32.mrf.mxu0
        %v615 = vadd.f32 0.0, %v614
        %616 = vmatmul.bf16.gmra.mxu0 %v539
        %v617 = vpop.f32.mrf.mxu0
        %v618 = vadd.f32 0.0, %v617
        %v619 = vpop.f32.mrf.mxu0
        %v620 = vadd.f32 0.0, %v619
        %621 = vmatmul.bf16.gmra.mxu0 %v542
        %v622 = vpop.f32.mrf.mxu0
        %v623 = vadd.f32 0.0, %v622
        %v624 = vpop.f32.mrf.mxu0
        %v625 = vadd.f32 0.0, %v624
        %626 = vmatmul.bf16.gmra.mxu0 %v545
        %v627 = vpop.f32.mrf.mxu0
        %v628 = vadd.f32 0.0, %v627
        %v629 = vpop.f32.mrf.mxu0
        %v630 = vadd.f32 0.0, %v629
        %631 = vmatmul.bf16.gmra.mxu0 %v548
        %v632 = vpop.f32.mrf.mxu0
        %v633 = vadd.f32 0.0, %v632
        %v634 = vpop.f32.mrf.mxu0
        %v635 = vadd.f32 0.0, %v634
        %636 = vmatmul.bf16.gmra.mxu0 %v551
        %v637 = vpop.f32.mrf.mxu0
        %v638 = vadd.f32 0.0, %v637
        %v639 = vpop.f32.mrf.mxu0
        %v640 = vadd.f32 0.0, %v639
        %641 = vmatmul.bf16.gmra.mxu0 %v554
        %v642 = vpop.f32.mrf.mxu0
        %v643 = vadd.f32 0.0, %v642
        %v644 = vpop.f32.mrf.mxu0
        %v645 = vadd.f32 0.0, %v644
        %646 = vmatmul.bf16.gmra.mxu0 %v557
        %v647 = vpop.f32.mrf.mxu0
        %v648 = vadd.f32 0.0, %v647
        %v649 = vpop.f32.mrf.mxu0
        %v650 = vadd.f32 0.0, %v649
        %651 = vdwg.mxu0
        %v652 = vadd.f32 %v365, %v573
        %v653 = vadd.f32 %v366, %v575
        %v654 = vadd.f32 %v367, %v578
        %v655 = vadd.f32 %v368, %v580
        %v656 = vadd.f32 %v369, %v583
        %v657 = vadd.f32 %v370, %v585
        %v658 = vadd.f32 %v371, %v588
        %v659 = vadd.f32 %v372, %v590
        %v660 = vadd.f32 %v373, %v593
        %v661 = vadd.f32 %v374, %v595
        %v662 = vadd.f32 %v375, %v598
        %v663 = vadd.f32 %v376, %v600
        %v664 = vadd.f32 %v377, %v603
        %v665 = vadd.f32 %v378, %v605
        %v666 = vadd.f32 %v379, %v608
        %v667 = vadd.f32 %v380, %v610
        %v668 = vadd.f32 %v381, %v613
        %v669 = vadd.f32 %v382, %v615
        %v670 = vadd.f32 %v383, %v618
        %v671 = vadd.f32 %v384, %v620
        %v672 = vadd.f32 %v385, %v623
        %v673 = vadd.f32 %v386, %v625
        %v674 = vadd.f32 %v387, %v628
        %v675 = vadd.f32 %v388, %v630
        %v676 = vadd.f32 %v389, %v633
        %v677 = vadd.f32 %v390, %v635
        %v678 = vadd.f32 %v391, %v638
        %v679 = vadd.f32 %v392, %v640
        %v680 = vadd.f32 %v393, %v643
        %v681 = vadd.f32 %v394, %v645
        %v682 = vadd.f32 %v395, %v648
        %v683 = vadd.f32 %v396, %v650
        %684 = vst [vmem:[#allocation2] sm:$0xff] %v652
        %685 = vst [vmem:[#allocation2 + $0x8] sm:$0xff] %v653
        %686 = vst [vmem:[#allocation2 + $0x10] sm:$0xff] %v654
        %687 = vst [vmem:[#allocation2 + $0x18] sm:$0xff] %v655
        %688 = vst [vmem:[#allocation2 + $0x20] sm:$0xff] %v656
        %689 = vst [vmem:[#allocation2 + $0x28] sm:$0xff] %v657
        %690 = vst [vmem:[#allocation2 + $0x30] sm:$0xff] %v658
        %691 = vst [vmem:[#allocation2 + $0x38] sm:$0xff] %v659
        %692 = vst [vmem:[#allocation2 + $0x40] sm:$0xff] %v660
        %693 = vst [vmem:[#allocation2 + $0x48] sm:$0xff] %v661
        %694 = vst [vmem:[#allocation2 + $0x50] sm:$0xff] %v662
        %695 = vst [vmem:[#allocation2 + $0x58] sm:$0xff] %v663
        %696 = vst [vmem:[#allocation2 + $0x60] sm:$0xff] %v664
        %697 = vst [vmem:[#allocation2 + $0x68] sm:$0xff] %v665
        %698 = vst [vmem:[#allocation2 + $0x70] sm:$0xff] %v666
        %699 = vst [vmem:[#allocation2 + $0x78] sm:$0xff] %v667
        %700 = vst [vmem:[#allocation2 + $0x80] sm:$0xff] %v668
        %701 = vst [vmem:[#allocation2 + $0x88] sm:$0xff] %v669
        %702 = vst [vmem:[#allocation2 + $0x90] sm:$0xff] %v670
        %703 = vst [vmem:[#allocation2 + $0x98] sm:$0xff] %v671
        %704 = vst [vmem:[#allocation2 + $0xa0] sm:$0xff] %v672
        %705 = vst [vmem:[#allocation2 + $0xa8] sm:$0xff] %v673
        %706 = vst [vmem:[#allocation2 + $0xb0] sm:$0xff] %v674
        %707 = vst [vmem:[#allocation2 + $0xb8] sm:$0xff] %v675
        %708 = vst [vmem:[#allocation2 + $0xc0] sm:$0xff] %v676
        %709 = vst [vmem:[#allocation2 + $0xc8] sm:$0xff] %v677
        %710 = vst [vmem:[#allocation2 + $0xd0] sm:$0xff] %v678
        %711 = vst [vmem:[#allocation2 + $0xd8] sm:$0xff] %v679
        %712 = vst [vmem:[#allocation2 + $0xe0] sm:$0xff] %v680
        %713 = vst [vmem:[#allocation2 + $0xe8] sm:$0xff] %v681
        %714 = vst [vmem:[#allocation2 + $0xf0] sm:$0xff] %v682
        %715 = vst [vmem:[#allocation2 + $0xf8] sm:$0xff] %v683
        // Predicated region
        $region49: #{tpu_custom_call.1} parent=39 // pred_check
          %p716 = pneg %p329
        $region50: #{tpu_custom_call.1} parent=39 // pred_check_branch
          %718 = sbr.rel (%p716) target = $region52
        $region51: #{tpu_custom_call.1} parent=39 // pred_region
          %s719 = sld [smem:[#allocation3]]
          %s720 = sld [smem:[#allocation3 + $0x1]]
          %v721 = vld [vmem:[#allocation2] sm:$0xff]
          %v722 = vld [vmem:[#allocation2 + $0x8] sm:$0xff]
          %v723 = vld [vmem:[#allocation2 + $0x10] sm:$0xff]
          %v724 = vld [vmem:[#allocation2 + $0x18] sm:$0xff]
          %v725 = vld [vmem:[#allocation2 + $0x20] sm:$0xff]
          %v726 = vld [vmem:[#allocation2 + $0x28] sm:$0xff]
          %v727 = vld [vmem:[#allocation2 + $0x30] sm:$0xff]
          %v728 = vld [vmem:[#allocation2 + $0x38] sm:$0xff]
          %v729 = vld [vmem:[#allocation2 + $0x40] sm:$0xff]
          %v730 = vld [vmem:[#allocation2 + $0x48] sm:$0xff]
          %v731 = vld [vmem:[#allocation2 + $0x50] sm:$0xff]
          %v732 = vld [vmem:[#allocation2 + $0x58] sm:$0xff]
          %v733 = vld [vmem:[#allocation2 + $0x60] sm:$0xff]
          %v734 = vld [vmem:[#allocation2 + $0x68] sm:$0xff]
          %v735 = vld [vmem:[#allocation2 + $0x70] sm:$0xff]
          %v736 = vld [vmem:[#allocation2 + $0x78] sm:$0xff]
          %v737 = vld [vmem:[#allocation2 + $0x80] sm:$0xff]
          %v738 = vld [vmem:[#allocation2 + $0x88] sm:$0xff]
          %v739 = vld [vmem:[#allocation2 + $0x90] sm:$0xff]
          %v740 = vld [vmem:[#allocation2 + $0x98] sm:$0xff]
          %v741 = vld [vmem:[#allocation2 + $0xa0] sm:$0xff]
          %v742 = vld [vmem:[#allocation2 + $0xa8] sm:$0xff]
          %v743 = vld [vmem:[#allocation2 + $0xb0] sm:$0xff]
          %v744 = vld [vmem:[#allocation2 + $0xb8] sm:$0xff]
          %v745 = vld [vmem:[#allocation2 + $0xc0] sm:$0xff]
          %v746 = vld [vmem:[#allocation2 + $0xc8] sm:$0xff]
          %v747 = vld [vmem:[#allocation2 + $0xd0] sm:$0xff]
          %v748 = vld [vmem:[#allocation2 + $0xd8] sm:$0xff]
          %v749 = vld [vmem:[#allocation2 + $0xe0] sm:$0xff]
          %v750 = vld [vmem:[#allocation2 + $0xe8] sm:$0xff]
          %v751 = vld [vmem:[#allocation2 + $0xf0] sm:$0xff]
          %v752 = vld [vmem:[#allocation2 + $0xf8] sm:$0xff]
          %v753 = vld [vmem:[%s323] sm:$0x1]
          %v755 = vperm.slane %v753, 0
          %v757 = vmul.f32 %v721, %v755
          %v758 = vmul.f32 %v722, %v755
          %v759 = vmul.f32 %v723, %v755
          %v760 = vmul.f32 %v724, %v755
          %v761 = vmul.f32 %v725, %v755
          %v762 = vmul.f32 %v726, %v755
          %v763 = vmul.f32 %v727, %v755
          %v764 = vmul.f32 %v728, %v755
          %v765 = vmul.f32 %v729, %v755
          %v766 = vmul.f32 %v730, %v755
          %v767 = vmul.f32 %v731, %v755
          %v768 = vmul.f32 %v732, %v755
          %v769 = vmul.f32 %v733, %v755
          %v770 = vmul.f32 %v734, %v755
          %v771 = vmul.f32 %v735, %v755
          %v772 = vmul.f32 %v736, %v755
          %v773 = vmul.f32 %v737, %v755
          %v774 = vmul.f32 %v738, %v755
          %v775 = vmul.f32 %v739, %v755
          %v776 = vmul.f32 %v740, %v755
          %v777 = vmul.f32 %v741, %v755
          %v778 = vmul.f32 %v742, %v755
          %v779 = vmul.f32 %v743, %v755
          %v780 = vmul.f32 %v744, %v755
          %v781 = vmul.f32 %v745, %v755
          %v782 = vmul.f32 %v746, %v755
          %v783 = vmul.f32 %v747, %v755
          %v784 = vmul.f32 %v748, %v755
          %v785 = vmul.f32 %v749, %v755
          %v786 = vmul.f32 %v750, %v755
          %v787 = vmul.f32 %v751, %v755
          %v788 = vmul.f32 %v752, %v755
          %v789 = vld [vmem:[%s326] sm:$0x1]
          %v791 = vperm.slane %v789, 0
          %v793 = vadd.f32 %v757, %v791
          %v794 = vadd.f32 %v758, %v791
          %v795 = vadd.f32 %v759, %v791
          %v796 = vadd.f32 %v760, %v791
          %v797 = vadd.f32 %v761, %v791
          %v798 = vadd.f32 %v762, %v791
          %v799 = vadd.f32 %v763, %v791
          %v800 = vadd.f32 %v764, %v791
          %v801 = vadd.f32 %v765, %v791
          %v802 = vadd.f32 %v766, %v791
          %v803 = vadd.f32 %v767, %v791
          %v804 = vadd.f32 %v768, %v791
          %v805 = vadd.f32 %v769, %v791
          %v806 = vadd.f32 %v770, %v791
          %v807 = vadd.f32 %v771, %v791
          %v808 = vadd.f32 %v772, %v791
          %v809 = vadd.f32 %v773, %v791
          %v810 = vadd.f32 %v774, %v791
          %v811 = vadd.f32 %v775, %v791
          %v812 = vadd.f32 %v776, %v791
          %v813 = vadd.f32 %v777, %v791
          %v814 = vadd.f32 %v778, %v791
          %v815 = vadd.f32 %v779, %v791
          %v816 = vadd.f32 %v780, %v791
          %v817 = vadd.f32 %v781, %v791
          %v818 = vadd.f32 %v782, %v791
          %v819 = vadd.f32 %v783, %v791
          %v820 = vadd.f32 %v784, %v791
          %v821 = vadd.f32 %v785, %v791
          %v822 = vadd.f32 %v786, %v791
          %v823 = vadd.f32 %v787, %v791
          %v824 = vadd.f32 %v788, %v791
          %vm825 = vcmp.gt.f32.partialorder %v793, 0.0
          %vm826 = vcmp.gt.f32.partialorder %v794, 0.0
          %vm827 = vcmp.gt.f32.partialorder %v795, 0.0
          %vm828 = vcmp.gt.f32.partialorder %v796, 0.0
          %vm829 = vcmp.gt.f32.partialorder %v797, 0.0
          %vm830 = vcmp.gt.f32.partialorder %v798, 0.0
          %vm831 = vcmp.gt.f32.partialorder %v799, 0.0
          %vm832 = vcmp.gt.f32.partialorder %v800, 0.0
          %vm833 = vcmp.gt.f32.partialorder %v801, 0.0
          %vm834 = vcmp.gt.f32.partialorder %v802, 0.0
          %vm835 = vcmp.gt.f32.partialorder %v803, 0.0
          %vm836 = vcmp.gt.f32.partialorder %v804, 0.0
          %vm837 = vcmp.gt.f32.partialorder %v805, 0.0
          %vm838 = vcmp.gt.f32.partialorder %v806, 0.0
          %vm839 = vcmp.gt.f32.partialorder %v807, 0.0
          %vm840 = vcmp.gt.f32.partialorder %v808, 0.0
          %vm841 = vcmp.gt.f32.partialorder %v809, 0.0
          %vm842 = vcmp.gt.f32.partialorder %v810, 0.0
          %vm843 = vcmp.gt.f32.partialorder %v811, 0.0
          %vm844 = vcmp.gt.f32.partialorder %v812, 0.0
          %vm845 = vcmp.gt.f32.partialorder %v813, 0.0
          %vm846 = vcmp.gt.f32.partialorder %v814, 0.0
          %vm847 = vcmp.gt.f32.partialorder %v815, 0.0
          %vm848 = vcmp.gt.f32.partialorder %v816, 0.0
          %vm849 = vcmp.gt.f32.partialorder %v817, 0.0
          %vm850 = vcmp.gt.f32.partialorder %v818, 0.0
          %vm851 = vcmp.gt.f32.partialorder %v819, 0.0
          %vm852 = vcmp.gt.f32.partialorder %v820, 0.0
          %vm853 = vcmp.gt.f32.partialorder %v821, 0.0
          %vm854 = vcmp.gt.f32.partialorder %v822, 0.0
          %vm855 = vcmp.gt.f32.partialorder %v823, 0.0
          %vm856 = vcmp.gt.f32.partialorder %v824, 0.0
          %v857 = vstv %s720
          %v858 = vstv %s719
          %v859 = vsel %vm825, %v857, %v858
          %v860 = vsel %vm826, %v857, %v858
          %v861 = vsel %vm827, %v857, %v858
          %v862 = vsel %vm828, %v857, %v858
          %v863 = vsel %vm829, %v857, %v858
          %v864 = vsel %vm830, %v857, %v858
          %v865 = vsel %vm831, %v857, %v858
          %v866 = vsel %vm832, %v857, %v858
          %v867 = vsel %vm833, %v857, %v858
          %v868 = vsel %vm834, %v857, %v858
          %v869 = vsel %vm835, %v857, %v858
          %v870 = vsel %vm836, %v857, %v858
          %v871 = vsel %vm837, %v857, %v858
          %v872 = vsel %vm838, %v857, %v858
          %v873 = vsel %vm839, %v857, %v858
          %v874 = vsel %vm840, %v857, %v858
          %v875 = vsel %vm841, %v857, %v858
          %v876 = vsel %vm842, %v857, %v858
          %v877 = vsel %vm843, %v857, %v858
          %v878 = vsel %vm844, %v857, %v858
          %v879 = vsel %vm845, %v857, %v858
          %v880 = vsel %vm846, %v857, %v858
          %v881 = vsel %vm847, %v857, %v858
          %v882 = vsel %vm848, %v857, %v858
          %v883 = vsel %vm849, %v857, %v858
          %v884 = vsel %vm850, %v857, %v858
          %v885 = vsel %vm851, %v857, %v858
          %v886 = vsel %vm852, %v857, %v858
          %v887 = vsel %vm853, %v857, %v858
          %v888 = vsel %vm854, %v857, %v858
          %v889 = vsel %vm855, %v857, %v858
          %v890 = vsel %vm856, %v857, %v858
          %v891 = vmul.f32 %v793, %v859
          %v892 = vmul.f32 %v794, %v860
          %v893 = vmul.f32 %v795, %v861
          %v894 = vmul.f32 %v796, %v862
          %v895 = vmul.f32 %v797, %v863
          %v896 = vmul.f32 %v798, %v864
          %v897 = vmul.f32 %v799, %v865
          %v898 = vmul.f32 %v800, %v866
          %v899 = vmul.f32 %v801, %v867
          %v900 = vmul.f32 %v802, %v868
          %v901 = vmul.f32 %v803, %v869
          %v902 = vmul.f32 %v804, %v870
          %v903 = vmul.f32 %v805, %v871
          %v904 = vmul.f32 %v806, %v872
          %v905 = vmul.f32 %v807, %v873
          %v906 = vmul.f32 %v808, %v874
          %v907 = vmul.f32 %v809, %v875
          %v908 = vmul.f32 %v810, %v876
          %v909 = vmul.f32 %v811, %v877
          %v910 = vmul.f32 %v812, %v878
          %v911 = vmul.f32 %v813, %v879
          %v912 = vmul.f32 %v814, %v880
          %v913 = vmul.f32 %v815, %v881
          %v914 = vmul.f32 %v816, %v882
          %v915 = vmul.f32 %v817, %v883
          %v916 = vmul.f32 %v818, %v884
          %v917 = vmul.f32 %v819, %v885
          %v918 = vmul.f32 %v820, %v886
          %v919 = vmul.f32 %v821, %v887
          %v920 = vmul.f32 %v822, %v888
          %v921 = vmul.f32 %v823, %v889
          %v922 = vmul.f32 %v824, %v890
          %923 = vst [vmem:[%s304] sm:$0xff] %v891
          %924 = vst [vmem:[%s304 + $0x8] sm:$0xff] %v892
          %925 = vst [vmem:[%s304 + $0x10] sm:$0xff] %v893
          %926 = vst [vmem:[%s304 + $0x18] sm:$0xff] %v894
          %927 = vst [vmem:[%s304 + $0x20] sm:$0xff] %v895
          %928 = vst [vmem:[%s304 + $0x28] sm:$0xff] %v896
          %929 = vst [vmem:[%s304 + $0x30] sm:$0xff] %v897
          %930 = vst [vmem:[%s304 + $0x38] sm:$0xff] %v898
          %931 = vst [vmem:[%s304 + $0x40] sm:$0xff] %v899
          %932 = vst [vmem:[%s304 + $0x48] sm:$0xff] %v900
          %933 = vst [vmem:[%s304 + $0x50] sm:$0xff] %v901
          %934 = vst [vmem:[%s304 + $0x58] sm:$0xff] %v902
          %935 = vst [vmem:[%s304 + $0x60] sm:$0xff] %v903
          %936 = vst [vmem:[%s304 + $0x68] sm:$0xff] %v904
          %937 = vst [vmem:[%s304 + $0x70] sm:$0xff] %v905
          %938 = vst [vmem:[%s304 + $0x78] sm:$0xff] %v906
          %939 = vst [vmem:[%s304 + $0x80] sm:$0xff] %v907
          %940 = vst [vmem:[%s304 + $0x88] sm:$0xff] %v908
          %941 = vst [vmem:[%s304 + $0x90] sm:$0xff] %v909
          %942 = vst [vmem:[%s304 + $0x98] sm:$0xff] %v910
          %943 = vst [vmem:[%s304 + $0xa0] sm:$0xff] %v911
          %944 = vst [vmem:[%s304 + $0xa8] sm:$0xff] %v912
          %945 = vst [vmem:[%s304 + $0xb0] sm:$0xff] %v913
          %946 = vst [vmem:[%s304 + $0xb8] sm:$0xff] %v914
          %947 = vst [vmem:[%s304 + $0xc0] sm:$0xff] %v915
          %948 = vst [vmem:[%s304 + $0xc8] sm:$0xff] %v916
          %949 = vst [vmem:[%s304 + $0xd0] sm:$0xff] %v917
          %950 = vst [vmem:[%s304 + $0xd8] sm:$0xff] %v918
          %951 = vst [vmem:[%s304 + $0xe0] sm:$0xff] %v919
          %952 = vst [vmem:[%s304 + $0xe8] sm:$0xff] %v920
          %953 = vst [vmem:[%s304 + $0xf0] sm:$0xff] %v921
          %954 = vst [vmem:[%s304 + $0xf8] sm:$0xff] %v922
        $region52: #{tpu_custom_call.1} parent=39 // pred_fallthru
          _
        %s955 = sand.u32 %s178, 1
        %s956 = scalar_lea.sflag [#allocation4], %s955
        %s957 = sand.u32 %s178, 1
        %s958 = smul.addr %s957, 256
        %s959 = scalar_lea.vmem [#allocation6], %s958
        // Predicated region
        $region53: #{tpu_custom_call.1} parent=39 // pred_check
          %p960 = pneg %p188
        $region54: #{tpu_custom_call.1} parent=39 // pred_check_branch
          %962 = sbr.rel (%p960) target = $region56
        $region55: #{tpu_custom_call.1} parent=39 // pred_region
          %s963 = smul.u32 32, %s25
          %965 = vsyncadd %s956, 0
          %s966 = sadd.s32 %s26, %s963
          %s967 = smul.addr %s966, 8
          %s968 = scalar_lea.hbm %s5, %s967
          %s969 = sshll.u32 %s959, 4
          %s970 = int_to_ptr.vmem [resolvable:$true] %s969
          %s971 = sshll.u32 %s968, 4
          %s972 = int_to_ptr.hbm [resolvable:$true] %s971
          %977 = dma.vmem_to_hbm [thread:$0]  %s970, 4096, %s972, %s956, 128, 128, 8
        $region56: #{tpu_custom_call.1} parent=39 // pred_fallthru
          _
      $region40: #{tpu_custom_call.1} parent=5 // pred_fallthru
        _
      %p978 = scmp.le.s32.totalorder 2, %s15
      // Predicated region
      $region57: #{tpu_custom_call.1} parent=5 // pred_check
        %p979 = pneg %p978
      $region58: #{tpu_custom_call.1} parent=5 // pred_check_branch
        %981 = sbr.rel (%p979) target = $region60
      $region59: #{tpu_custom_call.1} parent=5 // pred_region
        %s982 = ssub.s32 %s15, 2
        // Predicated region
        $region61: #{tpu_custom_call.1} parent=59 // pred_check
          %p983 = pneg %p194
        $region62: #{tpu_custom_call.1} parent=59 // pred_check_branch
          %985 = sbr.rel (%p983) target = $region64
        $region63: #{tpu_custom_call.1} parent=59 // pred_region
          %s986 = sand.u32 %s179, 1
          %s987 = scalar_lea.sflag [#allocation4], %s986
          %s988 = sand.u32 %s179, 1
          %s989 = smul.addr %s988, 256
          %s990 = scalar_lea.vmem [#allocation6], %s989
          %992 = dma.done %s987, 4096
        $region64: #{tpu_custom_call.1} parent=59 // pred_fallthru
          _
      $region60: #{tpu_custom_call.1} parent=5 // pred_fallthru
        _
    $region6: #{tpu_custom_call.1} parent=1 // loop_footer
      %s19 = sadd.s32 1, %s15
    $region7: #{tpu_custom_call.1} parent=1 // loop_footer_branch
      %14 = sbr.rel target = $region3
    $region8: #{tpu_custom_call.1} parent=1 // loop_exit
      _
    %993 = vsyncpa [#allocation4], 1
    %s994 = scalar_lea.sflag [#allocation4], 1
    %995 = vsyncpa %s994, 1
    %996 = vsyncpa [#allocation5], 1
    %s997 = scalar_lea.sflag [#allocation5], 1
    %998 = vsyncpa %s997, 1

</llo_original>
